<compile_context>
chip_gen: v5e
topology: v5e:2x2
jax: 0.10.0
libtpu: 0.0.40
codegen_flags: <defaults>
</compile_context>

<pallas_src>
import functools

import jax
import jax.numpy as jnp
from jax import lax
from jax.experimental import pallas as pl
from jax.experimental.pallas import tpu as pltpu


def _attention_kernel(x_ref, wqkv_ref, wproj_ref, bproj_ref, o_ref, *,
                      batch, seq, num_heads, head_dim, scale):
    """Fused multi-head attention forward over the whole (B*N, C) token slab.

    x_ref:     (B*N, C)   tokens (compute dtype: f32, or bf16 on v6e/v7x)
    wqkv_ref:  (C, 3C)    qkv weight, (in, out) layout, [q | k | v] along lanes
    wproj_ref: (C, C)     output projection weight, (in, out) layout
    bproj_ref: (1, C)     output projection bias (f32)
    o_ref:     (B*N, C)   output tokens
    """
    C = num_heads * head_dim
    cdt = x_ref.dtype                      # MXU input dtype (f32, or bf16 on v6e/v7x)
    x = x_ref[...]                         # (B*N, C)

    # Start the output accumulator from the broadcast bias (hoisted out of the head loop).
    y = jnp.broadcast_to(bproj_ref[...].astype(jnp.float32), (batch * seq, C))

    # Static head loop with per-head accumulate: only one (B*N, C) accumulator stays live.
    for h in range(num_heads):
        lo = h * head_dim
        hi = lo + head_dim
        # Slicing the weight Refs is a static, zero-cost view (no activation lane-slicing).
        wq = wqkv_ref[:, 0 * C + lo:0 * C + hi]        # (C, D)
        wk = wqkv_ref[:, 1 * C + lo:1 * C + hi]        # (C, D)
        wv = wqkv_ref[:, 2 * C + lo:2 * C + hi]        # (C, D)

        # Scale q here: O(N*D) multiplies instead of O(N^2) on the score matrix.
        q = (jnp.dot(x, wq, preferred_element_type=jnp.float32) * scale).astype(cdt)
        k = jnp.dot(x, wk, preferred_element_type=jnp.float32).astype(cdt)
        v = jnp.dot(x, wv, preferred_element_type=jnp.float32).astype(cdt)

        # Split the fused batch back out along sublanes (seq == 8 -> tile-aligned split).
        q3 = q.reshape(batch, seq, head_dim)
        k3 = k.reshape(batch, seq, head_dim)
        v3 = v.reshape(batch, seq, head_dim)

        # Scores with the K-transpose folded into the contraction (no explicit .T).
        s = lax.dot_general(q3, k3,
                            dimension_numbers=(((2,), (2,)), ((0,), (0,))),
                            preferred_element_type=jnp.float32)      # (B, N, N)

        # Numerically-stable softmax in f32; denominator via EUP approx reciprocal + Newton.
        s = s - jnp.max(s, axis=-1, keepdims=True)
        p = jnp.exp(s)
        denom = jnp.sum(p, axis=-1, keepdims=True)
        r = pl.reciprocal(denom, approx=True)
        r = r * (2.0 - denom * r)                      # one Newton step -> ~f32 accuracy
        p = (p * r).astype(cdt)

        head_out = lax.dot_general(p, v3,
                                   dimension_numbers=(((2,), (1,)), ((0,), (0,))),
                                   preferred_element_type=jnp.float32)  # (B, N, D)
        head_out = head_out.reshape(batch * seq, head_dim).astype(cdt)

        # Per-head output projection accumulate; the row-slice of w_proj is a free,
        # sublane-aligned Ref view.  Replaces the lane-dim concatenate of head outputs.
        y = y + jnp.dot(head_out, wproj_ref[lo:hi, :],
                        preferred_element_type=jnp.float32)

    # TODO(synk): if the production channel dim stays < 128, pack batches into lanes for a
    # lane-dense output store; for large N, restructure as flash-style q/kv tiling with an
    # online softmax so the (N,N) scores never materialize (v7x has only 64 MiB VMEM).
    o_ref[...] = y.astype(o_ref.dtype)


def attention_forward(x, w_qkv, w_proj, b_proj, *, num_heads, scale=None,
                      compute_dtype=None):
    """x: (B, N, C); w_qkv: (C, 3C); w_proj: (C, C); b_proj: (C,).

    compute_dtype: optional MXU-input dtype (e.g. jnp.bfloat16 for v6e/v7x throughput and
    halved weight DMA).  Accumulation is always f32; the output keeps x.dtype.
    """
    B, N, C = x.shape
    head_dim = C // num_heads
    scale = scale if scale is not None else head_dim ** (-0.5)
    out_dtype = x.dtype
    cdt = compute_dtype if compute_dtype is not None else x.dtype

    # Fold batch into the token axis so the projections see one dense (B*N, C) slab and the
    # whole problem runs as a single grid step (amortizes per-step pipeline overhead).
    x2 = x.reshape(B * N, C).astype(cdt)
    w_qkv = w_qkv.astype(cdt)
    w_proj = w_proj.astype(cdt)
    b_proj2d = b_proj.reshape(1, C).astype(jnp.float32)

    kernel = functools.partial(
        _attention_kernel, batch=B, seq=N, num_heads=num_heads,
        head_dim=head_dim, scale=scale)

    out2 = pl.pallas_call(
        kernel,
        out_shape=jax.ShapeDtypeStruct((B * N, C), out_dtype),
        grid_spec=pltpu.PrefetchScalarGridSpec(
            num_scalar_prefetch=0,
            grid=(1,),
            in_specs=[
                pl.BlockSpec((B * N, C), lambda i: (0, 0)),
                pl.BlockSpec((C, 3 * C), lambda i: (0, 0)),
                pl.BlockSpec((C, C), lambda i: (0, 0)),
                pl.BlockSpec((1, C), lambda i: (0, 0)),
            ],
            out_specs=pl.BlockSpec((B * N, C), lambda i: (0, 0)),
        ),
        # Single grid step; weights are fetched once.  At production C (>=768) also set
        # vmem_limit_bytes and single-buffer the weight specs (pl.Buffered(1)).
        compiler_params=pltpu.CompilerParams(
            dimension_semantics=("arbitrary",)),
    )(x2, w_qkv, w_proj, b_proj2d)
    return out2.reshape(B, N, C)


def attention_reference(x, w_qkv, w_proj, b_proj, *, num_heads, scale=None):
    """Pure-JAX reference mirroring the PyTorch forward exactly."""
    B, N, C = x.shape
    D = C // num_heads
    scale = scale if scale is not None else D ** (-0.5)
    qkv = x @ w_qkv                                   # (B, N, 3C)
    qkv = qkv.reshape(B, N, 3, num_heads, D).transpose(2, 0, 3, 1, 4)
    q, k, v = qkv[0], qkv[1], qkv[2]                  # (B, H, N, D)
    attn = (q @ jnp.swapaxes(k, -2, -1)) * scale
    attn = jax.nn.softmax(attn, axis=-1)
    out = (attn @ v).transpose(0, 2, 1, 3).reshape(B, N, C)
    return out @ w_proj + b_proj


if __name__ == "__main__":
    # Small shapes consistent with the module: B=2 batches, N=8 patches, C=32 dim, 4 heads.
    B, N, C, H = 2, 8, 32, 4

    key = jax.random.PRNGKey(0)
    kx, kqkv, kproj, kb = jax.random.split(key, 4)

    x = jax.random.normal(kx, (B, N, C), dtype=jnp.float32)
    # Deterministic synthetic parameters, stored as (in, out) so the kernel computes x @ W
    # (equivalent to PyTorch's x @ W.T for nn.Linear).
    w_qkv = jax.random.normal(kqkv, (C, 3 * C), dtype=jnp.float32) * 0.05
    w_proj = jax.random.normal(kproj, (C, C), dtype=jnp.float32) * 0.05
    b_proj = jax.random.normal(kb, (C,), dtype=jnp.float32) * 0.05

    ref = attention_reference(x, w_qkv, w_proj, b_proj, num_heads=H)

    # f32 MXU path (matches the reference tightly).
    out = attention_forward(x, w_qkv, w_proj, b_proj, num_heads=H)
    out = jax.block_until_ready(out)
    assert out.shape == (B, N, C)
    assert jnp.allclose(out, ref, atol=1e-4, rtol=1e-4), "f32 mismatch vs reference"

    # bf16 MXU path (v6e/v7x throughput; accumulation stays f32) -- looser tolerance.
    out_bf16 = attention_forward(x, w_qkv, w_proj, b_proj, num_heads=H,
                                 compute_dtype=jnp.bfloat16)
    out_bf16 = jax.block_until_ready(out_bf16)
    assert jnp.allclose(out_bf16, ref, atol=3e-2, rtol=3e-2), "bf16 mismatch vs reference"

    print("KERNEL_OK")
</pallas_src>

<mosaic_0001>
module attributes {stable_mosaic.version = 11 : i64} {
  func.func @_attention_kernel(%arg0: i32, %arg1: memref<16x32xf32, #tpu.memory_space<vmem>>, %arg2: memref<32x96xf32, #tpu.memory_space<vmem>>, %arg3: memref<32x32xf32, #tpu.memory_space<vmem>>, %arg4: memref<1x32xf32, #tpu.memory_space<vmem>>, %arg5: memref<16x32xf32, #tpu.memory_space<vmem>>) attributes {dimension_semantics = [#tpu.dimension_semantics<arbitrary>], iteration_bounds = array<i64: 1>, scalar_prefetch = 0 : i64, scratch_operands = 0 : i64, tpu.core_type = #tpu.core_type<tc>, window_params = [{pipeline_mode = #tpu.pipeline_mode<synchronous>, transform_indices = @transform_0, window_bounds = array<i64: 16, 32>}, {pipeline_mode = #tpu.pipeline_mode<synchronous>, transform_indices = @transform_1, window_bounds = array<i64: 32, 96>}, {pipeline_mode = #tpu.pipeline_mode<synchronous>, transform_indices = @transform_2, window_bounds = array<i64: 32, 32>}, {pipeline_mode = #tpu.pipeline_mode<synchronous>, transform_indices = @transform_3, window_bounds = array<i64: 1, 32>}, {pipeline_mode = #tpu.pipeline_mode<synchronous>, transform_indices = @transform_4, window_bounds = array<i64: 16, 32>}]} {
    %c0 = arith.constant 0 : index
    %c0_0 = arith.constant 0 : index
    %0 = vector.load %arg1[%c0, %c0_0] : memref<16x32xf32, #tpu.memory_space<vmem>>, vector<16x32xf32>
    %c0_1 = arith.constant 0 : index
    %c0_2 = arith.constant 0 : index
    %1 = vector.load %arg4[%c0_1, %c0_2] : memref<1x32xf32, #tpu.memory_space<vmem>>, vector<1x32xf32>
    %2 = vector.shape_cast %1 : vector<1x32xf32> to vector<1x32xf32>
    %3 = vector.broadcast %2 : vector<1x32xf32> to vector<16x32xf32>
    %c0_3 = arith.constant 0 : index
    %c0_4 = arith.constant 0 : index
    %4 = vector.load %arg2[%c0_3, %c0_4] : memref<32x96xf32, #tpu.memory_space<vmem>>, vector<32x8xf32>
    %c0_5 = arith.constant 0 : index
    %c32 = arith.constant 32 : index
    %5 = vector.load %arg2[%c0_5, %c32] : memref<32x96xf32, #tpu.memory_space<vmem>>, vector<32x8xf32>
    %c0_6 = arith.constant 0 : index
    %c64 = arith.constant 64 : index
    %6 = vector.load %arg2[%c0_6, %c64] : memref<32x96xf32, #tpu.memory_space<vmem>>, vector<32x8xf32>
    %cst = arith.constant dense<0.000000e+00> : vector<16x8xf32>
    %7 = tpu.matmul %0, %4, %cst {dimension_numbers = #tpu.dot_dimension_numbers<[1], [0], [0], [1], [0, 0, 1, 1], [], []>} : vector<16x32xf32>, vector<32x8xf32>, vector<16x8xf32> -> vector<16x8xf32>
    %cst_7 = arith.constant 0.353553385 : f32
    %8 = vector.broadcast %cst_7 : f32 to vector<16x8xf32>
    %9 = arith.mulf %7, %8 : vector<16x8xf32>
    %cst_8 = arith.constant dense<0.000000e+00> : vector<16x8xf32>
    %10 = tpu.matmul %0, %5, %cst_8 {dimension_numbers = #tpu.dot_dimension_numbers<[1], [0], [0], [1], [0, 0, 1, 1], [], []>} : vector<16x32xf32>, vector<32x8xf32>, vector<16x8xf32> -> vector<16x8xf32>
    %cst_9 = arith.constant dense<0.000000e+00> : vector<16x8xf32>
    %11 = tpu.matmul %0, %6, %cst_9 {dimension_numbers = #tpu.dot_dimension_numbers<[1], [0], [0], [1], [0, 0, 1, 1], [], []>} : vector<16x32xf32>, vector<32x8xf32>, vector<16x8xf32> -> vector<16x8xf32>
    %12 = vector.shape_cast %9 : vector<16x8xf32> to vector<2x8x8xf32>
    %13 = vector.shape_cast %10 : vector<16x8xf32> to vector<2x8x8xf32>
    %14 = vector.shape_cast %11 : vector<16x8xf32> to vector<2x8x8xf32>
    %cst_10 = arith.constant dense<0.000000e+00> : vector<2x8x8xf32>
    %15 = tpu.matmul %12, %13, %cst_10 {dimension_numbers = #tpu.dot_dimension_numbers<[2], [2], [1], [1], [0, 0, 0, 1, 1, 1], [0], [0]>} : vector<2x8x8xf32>, vector<2x8x8xf32>, vector<2x8x8xf32> -> vector<2x8x8xf32>
    %cst_11 = arith.constant dense<0xFF800000> : vector<2x8xf32>
    %16 = vector.multi_reduction <maximumf>, %15, %cst_11 [2] : vector<2x8x8xf32> to vector<2x8xf32>
    %17 = vector.shape_cast %16 : vector<2x8xf32> to vector<2x8x1xf32>
    %18 = vector.broadcast %17 : vector<2x8x1xf32> to vector<2x8x8xf32>
    %19 = arith.subf %15, %18 : vector<2x8x8xf32>
    %20 = math.exp %19 : vector<2x8x8xf32>
    %cst_12 = arith.constant dense<0.000000e+00> : vector<2x8xf32>
    %21 = vector.multi_reduction <add>, %20, %cst_12 [2] : vector<2x8x8xf32> to vector<2x8xf32>
    %22 = vector.shape_cast %21 : vector<2x8xf32> to vector<2x8x1xf32>
    %23 = tpu.reciprocal %22 {approx = true} : vector<2x8x1xf32> -> vector<2x8x1xf32>
    %24 = arith.mulf %22, %23 : vector<2x8x1xf32>
    %cst_13 = arith.constant 2.000000e+00 : f32
    %25 = vector.broadcast %cst_13 : f32 to vector<2x8x1xf32>
    %26 = arith.subf %25, %24 : vector<2x8x1xf32>
    %27 = arith.mulf %23, %26 : vector<2x8x1xf32>
    %28 = vector.broadcast %27 : vector<2x8x1xf32> to vector<2x8x8xf32>
    %29 = arith.mulf %20, %28 : vector<2x8x8xf32>
    %cst_14 = arith.constant dense<0.000000e+00> : vector<2x8x8xf32>
    %30 = tpu.matmul %29, %14, %cst_14 {dimension_numbers = #tpu.dot_dimension_numbers<[2], [1], [1], [2], [0, 0, 0, 1, 1, 2], [0], [0]>} : vector<2x8x8xf32>, vector<2x8x8xf32>, vector<2x8x8xf32> -> vector<2x8x8xf32>
    %31 = vector.shape_cast %30 : vector<2x8x8xf32> to vector<16x8xf32>
    %c0_15 = arith.constant 0 : index
    %c0_16 = arith.constant 0 : index
    %32 = vector.load %arg3[%c0_15, %c0_16] : memref<32x32xf32, #tpu.memory_space<vmem>>, vector<8x32xf32>
    %cst_17 = arith.constant dense<0.000000e+00> : vector<16x32xf32>
    %33 = tpu.matmul %31, %32, %cst_17 {dimension_numbers = #tpu.dot_dimension_numbers<[1], [0], [0], [1], [0, 0, 1, 1], [], []>} : vector<16x8xf32>, vector<8x32xf32>, vector<16x32xf32> -> vector<16x32xf32>
    %34 = arith.addf %3, %33 : vector<16x32xf32>
    %c0_18 = arith.constant 0 : index
    %c8 = arith.constant 8 : index
    %35 = vector.load %arg2[%c0_18, %c8] : memref<32x96xf32, #tpu.memory_space<vmem>>, vector<32x8xf32>
    %c0_19 = arith.constant 0 : index
    %c40 = arith.constant 40 : index
    %36 = vector.load %arg2[%c0_19, %c40] : memref<32x96xf32, #tpu.memory_space<vmem>>, vector<32x8xf32>
    %c0_20 = arith.constant 0 : index
    %c72 = arith.constant 72 : index
    %37 = vector.load %arg2[%c0_20, %c72] : memref<32x96xf32, #tpu.memory_space<vmem>>, vector<32x8xf32>
    %cst_21 = arith.constant dense<0.000000e+00> : vector<16x8xf32>
    %38 = tpu.matmul %0, %35, %cst_21 {dimension_numbers = #tpu.dot_dimension_numbers<[1], [0], [0], [1], [0, 0, 1, 1], [], []>} : vector<16x32xf32>, vector<32x8xf32>, vector<16x8xf32> -> vector<16x8xf32>
    %cst_22 = arith.constant 0.353553385 : f32
    %39 = vector.broadcast %cst_22 : f32 to vector<16x8xf32>
    %40 = arith.mulf %38, %39 : vector<16x8xf32>
    %cst_23 = arith.constant dense<0.000000e+00> : vector<16x8xf32>
    %41 = tpu.matmul %0, %36, %cst_23 {dimension_numbers = #tpu.dot_dimension_numbers<[1], [0], [0], [1], [0, 0, 1, 1], [], []>} : vector<16x32xf32>, vector<32x8xf32>, vector<16x8xf32> -> vector<16x8xf32>
    %cst_24 = arith.constant dense<0.000000e+00> : vector<16x8xf32>
    %42 = tpu.matmul %0, %37, %cst_24 {dimension_numbers = #tpu.dot_dimension_numbers<[1], [0], [0], [1], [0, 0, 1, 1], [], []>} : vector<16x32xf32>, vector<32x8xf32>, vector<16x8xf32> -> vector<16x8xf32>
    %43 = vector.shape_cast %40 : vector<16x8xf32> to vector<2x8x8xf32>
    %44 = vector.shape_cast %41 : vector<16x8xf32> to vector<2x8x8xf32>
    %45 = vector.shape_cast %42 : vector<16x8xf32> to vector<2x8x8xf32>
    %cst_25 = arith.constant dense<0.000000e+00> : vector<2x8x8xf32>
    %46 = tpu.matmul %43, %44, %cst_25 {dimension_numbers = #tpu.dot_dimension_numbers<[2], [2], [1], [1], [0, 0, 0, 1, 1, 1], [0], [0]>} : vector<2x8x8xf32>, vector<2x8x8xf32>, vector<2x8x8xf32> -> vector<2x8x8xf32>
    %cst_26 = arith.constant dense<0xFF800000> : vector<2x8xf32>
    %47 = vector.multi_reduction <maximumf>, %46, %cst_26 [2] : vector<2x8x8xf32> to vector<2x8xf32>
    %48 = vector.shape_cast %47 : vector<2x8xf32> to vector<2x8x1xf32>
    %49 = vector.broadcast %48 : vector<2x8x1xf32> to vector<2x8x8xf32>
    %50 = arith.subf %46, %49 : vector<2x8x8xf32>
    %51 = math.exp %50 : vector<2x8x8xf32>
    %cst_27 = arith.constant dense<0.000000e+00> : vector<2x8xf32>
    %52 = vector.multi_reduction <add>, %51, %cst_27 [2] : vector<2x8x8xf32> to vector<2x8xf32>
    %53 = vector.shape_cast %52 : vector<2x8xf32> to vector<2x8x1xf32>
    %54 = tpu.reciprocal %53 {approx = true} : vector<2x8x1xf32> -> vector<2x8x1xf32>
    %55 = arith.mulf %53, %54 : vector<2x8x1xf32>
    %cst_28 = arith.constant 2.000000e+00 : f32
    %56 = vector.broadcast %cst_28 : f32 to vector<2x8x1xf32>
    %57 = arith.subf %56, %55 : vector<2x8x1xf32>
    %58 = arith.mulf %54, %57 : vector<2x8x1xf32>
    %59 = vector.broadcast %58 : vector<2x8x1xf32> to vector<2x8x8xf32>
    %60 = arith.mulf %51, %59 : vector<2x8x8xf32>
    %cst_29 = arith.constant dense<0.000000e+00> : vector<2x8x8xf32>
    %61 = tpu.matmul %60, %45, %cst_29 {dimension_numbers = #tpu.dot_dimension_numbers<[2], [1], [1], [2], [0, 0, 0, 1, 1, 2], [0], [0]>} : vector<2x8x8xf32>, vector<2x8x8xf32>, vector<2x8x8xf32> -> vector<2x8x8xf32>
    %62 = vector.shape_cast %61 : vector<2x8x8xf32> to vector<16x8xf32>
    %c8_30 = arith.constant 8 : index
    %c0_31 = arith.constant 0 : index
    %63 = vector.load %arg3[%c8_30, %c0_31] : memref<32x32xf32, #tpu.memory_space<vmem>>, vector<8x32xf32>
    %cst_32 = arith.constant dense<0.000000e+00> : vector<16x32xf32>
    %64 = tpu.matmul %62, %63, %cst_32 {dimension_numbers = #tpu.dot_dimension_numbers<[1], [0], [0], [1], [0, 0, 1, 1], [], []>} : vector<16x8xf32>, vector<8x32xf32>, vector<16x32xf32> -> vector<16x32xf32>
    %65 = arith.addf %34, %64 : vector<16x32xf32>
    %c0_33 = arith.constant 0 : index
    %c16 = arith.constant 16 : index
    %66 = vector.load %arg2[%c0_33, %c16] : memref<32x96xf32, #tpu.memory_space<vmem>>, vector<32x8xf32>
    %c0_34 = arith.constant 0 : index
    %c48 = arith.constant 48 : index
    %67 = vector.load %arg2[%c0_34, %c48] : memref<32x96xf32, #tpu.memory_space<vmem>>, vector<32x8xf32>
    %c0_35 = arith.constant 0 : index
    %c80 = arith.constant 80 : index
    %68 = vector.load %arg2[%c0_35, %c80] : memref<32x96xf32, #tpu.memory_space<vmem>>, vector<32x8xf32>
    %cst_36 = arith.constant dense<0.000000e+00> : vector<16x8xf32>
    %69 = tpu.matmul %0, %66, %cst_36 {dimension_numbers = #tpu.dot_dimension_numbers<[1], [0], [0], [1], [0, 0, 1, 1], [], []>} : vector<16x32xf32>, vector<32x8xf32>, vector<16x8xf32> -> vector<16x8xf32>
    %cst_37 = arith.constant 0.353553385 : f32
    %70 = vector.broadcast %cst_37 : f32 to vector<16x8xf32>
    %71 = arith.mulf %69, %70 : vector<16x8xf32>
    %cst_38 = arith.constant dense<0.000000e+00> : vector<16x8xf32>
    %72 = tpu.matmul %0, %67, %cst_38 {dimension_numbers = #tpu.dot_dimension_numbers<[1], [0], [0], [1], [0, 0, 1, 1], [], []>} : vector<16x32xf32>, vector<32x8xf32>, vector<16x8xf32> -> vector<16x8xf32>
    %cst_39 = arith.constant dense<0.000000e+00> : vector<16x8xf32>
    %73 = tpu.matmul %0, %68, %cst_39 {dimension_numbers = #tpu.dot_dimension_numbers<[1], [0], [0], [1], [0, 0, 1, 1], [], []>} : vector<16x32xf32>, vector<32x8xf32>, vector<16x8xf32> -> vector<16x8xf32>
    %74 = vector.shape_cast %71 : vector<16x8xf32> to vector<2x8x8xf32>
    %75 = vector.shape_cast %72 : vector<16x8xf32> to vector<2x8x8xf32>
    %76 = vector.shape_cast %73 : vector<16x8xf32> to vector<2x8x8xf32>
    %cst_40 = arith.constant dense<0.000000e+00> : vector<2x8x8xf32>
    %77 = tpu.matmul %74, %75, %cst_40 {dimension_numbers = #tpu.dot_dimension_numbers<[2], [2], [1], [1], [0, 0, 0, 1, 1, 1], [0], [0]>} : vector<2x8x8xf32>, vector<2x8x8xf32>, vector<2x8x8xf32> -> vector<2x8x8xf32>
    %cst_41 = arith.constant dense<0xFF800000> : vector<2x8xf32>
    %78 = vector.multi_reduction <maximumf>, %77, %cst_41 [2] : vector<2x8x8xf32> to vector<2x8xf32>
    %79 = vector.shape_cast %78 : vector<2x8xf32> to vector<2x8x1xf32>
    %80 = vector.broadcast %79 : vector<2x8x1xf32> to vector<2x8x8xf32>
    %81 = arith.subf %77, %80 : vector<2x8x8xf32>
    %82 = math.exp %81 : vector<2x8x8xf32>
    %cst_42 = arith.constant dense<0.000000e+00> : vector<2x8xf32>
    %83 = vector.multi_reduction <add>, %82, %cst_42 [2] : vector<2x8x8xf32> to vector<2x8xf32>
    %84 = vector.shape_cast %83 : vector<2x8xf32> to vector<2x8x1xf32>
    %85 = tpu.reciprocal %84 {approx = true} : vector<2x8x1xf32> -> vector<2x8x1xf32>
    %86 = arith.mulf %84, %85 : vector<2x8x1xf32>
    %cst_43 = arith.constant 2.000000e+00 : f32
    %87 = vector.broadcast %cst_43 : f32 to vector<2x8x1xf32>
    %88 = arith.subf %87, %86 : vector<2x8x1xf32>
    %89 = arith.mulf %85, %88 : vector<2x8x1xf32>
    %90 = vector.broadcast %89 : vector<2x8x1xf32> to vector<2x8x8xf32>
    %91 = arith.mulf %82, %90 : vector<2x8x8xf32>
    %cst_44 = arith.constant dense<0.000000e+00> : vector<2x8x8xf32>
    %92 = tpu.matmul %91, %76, %cst_44 {dimension_numbers = #tpu.dot_dimension_numbers<[2], [1], [1], [2], [0, 0, 0, 1, 1, 2], [0], [0]>} : vector<2x8x8xf32>, vector<2x8x8xf32>, vector<2x8x8xf32> -> vector<2x8x8xf32>
    %93 = vector.shape_cast %92 : vector<2x8x8xf32> to vector<16x8xf32>
    %c16_45 = arith.constant 16 : index
    %c0_46 = arith.constant 0 : index
    %94 = vector.load %arg3[%c16_45, %c0_46] : memref<32x32xf32, #tpu.memory_space<vmem>>, vector<8x32xf32>
    %cst_47 = arith.constant dense<0.000000e+00> : vector<16x32xf32>
    %95 = tpu.matmul %93, %94, %cst_47 {dimension_numbers = #tpu.dot_dimension_numbers<[1], [0], [0], [1], [0, 0, 1, 1], [], []>} : vector<16x8xf32>, vector<8x32xf32>, vector<16x32xf32> -> vector<16x32xf32>
    %96 = arith.addf %65, %95 : vector<16x32xf32>
    %c0_48 = arith.constant 0 : index
    %c24 = arith.constant 24 : index
    %97 = vector.load %arg2[%c0_48, %c24] : memref<32x96xf32, #tpu.memory_space<vmem>>, vector<32x8xf32>
    %c0_49 = arith.constant 0 : index
    %c56 = arith.constant 56 : index
    %98 = vector.load %arg2[%c0_49, %c56] : memref<32x96xf32, #tpu.memory_space<vmem>>, vector<32x8xf32>
    %c0_50 = arith.constant 0 : index
    %c88 = arith.constant 88 : index
    %99 = vector.load %arg2[%c0_50, %c88] : memref<32x96xf32, #tpu.memory_space<vmem>>, vector<32x8xf32>
    %cst_51 = arith.constant dense<0.000000e+00> : vector<16x8xf32>
    %100 = tpu.matmul %0, %97, %cst_51 {dimension_numbers = #tpu.dot_dimension_numbers<[1], [0], [0], [1], [0, 0, 1, 1], [], []>} : vector<16x32xf32>, vector<32x8xf32>, vector<16x8xf32> -> vector<16x8xf32>
    %cst_52 = arith.constant 0.353553385 : f32
    %101 = vector.broadcast %cst_52 : f32 to vector<16x8xf32>
    %102 = arith.mulf %100, %101 : vector<16x8xf32>
    %cst_53 = arith.constant dense<0.000000e+00> : vector<16x8xf32>
    %103 = tpu.matmul %0, %98, %cst_53 {dimension_numbers = #tpu.dot_dimension_numbers<[1], [0], [0], [1], [0, 0, 1, 1], [], []>} : vector<16x32xf32>, vector<32x8xf32>, vector<16x8xf32> -> vector<16x8xf32>
    %cst_54 = arith.constant dense<0.000000e+00> : vector<16x8xf32>
    %104 = tpu.matmul %0, %99, %cst_54 {dimension_numbers = #tpu.dot_dimension_numbers<[1], [0], [0], [1], [0, 0, 1, 1], [], []>} : vector<16x32xf32>, vector<32x8xf32>, vector<16x8xf32> -> vector<16x8xf32>
    %105 = vector.shape_cast %102 : vector<16x8xf32> to vector<2x8x8xf32>
    %106 = vector.shape_cast %103 : vector<16x8xf32> to vector<2x8x8xf32>
    %107 = vector.shape_cast %104 : vector<16x8xf32> to vector<2x8x8xf32>
    %cst_55 = arith.constant dense<0.000000e+00> : vector<2x8x8xf32>
    %108 = tpu.matmul %105, %106, %cst_55 {dimension_numbers = #tpu.dot_dimension_numbers<[2], [2], [1], [1], [0, 0, 0, 1, 1, 1], [0], [0]>} : vector<2x8x8xf32>, vector<2x8x8xf32>, vector<2x8x8xf32> -> vector<2x8x8xf32>
    %cst_56 = arith.constant dense<0xFF800000> : vector<2x8xf32>
    %109 = vector.multi_reduction <maximumf>, %108, %cst_56 [2] : vector<2x8x8xf32> to vector<2x8xf32>
    %110 = vector.shape_cast %109 : vector<2x8xf32> to vector<2x8x1xf32>
    %111 = vector.broadcast %110 : vector<2x8x1xf32> to vector<2x8x8xf32>
    %112 = arith.subf %108, %111 : vector<2x8x8xf32>
    %113 = math.exp %112 : vector<2x8x8xf32>
    %cst_57 = arith.constant dense<0.000000e+00> : vector<2x8xf32>
    %114 = vector.multi_reduction <add>, %113, %cst_57 [2] : vector<2x8x8xf32> to vector<2x8xf32>
    %115 = vector.shape_cast %114 : vector<2x8xf32> to vector<2x8x1xf32>
    %116 = tpu.reciprocal %115 {approx = true} : vector<2x8x1xf32> -> vector<2x8x1xf32>
    %117 = arith.mulf %115, %116 : vector<2x8x1xf32>
    %cst_58 = arith.constant 2.000000e+00 : f32
    %118 = vector.broadcast %cst_58 : f32 to vector<2x8x1xf32>
    %119 = arith.subf %118, %117 : vector<2x8x1xf32>
    %120 = arith.mulf %116, %119 : vector<2x8x1xf32>
    %121 = vector.broadcast %120 : vector<2x8x1xf32> to vector<2x8x8xf32>
    %122 = arith.mulf %113, %121 : vector<2x8x8xf32>
    %cst_59 = arith.constant dense<0.000000e+00> : vector<2x8x8xf32>
    %123 = tpu.matmul %122, %107, %cst_59 {dimension_numbers = #tpu.dot_dimension_numbers<[2], [1], [1], [2], [0, 0, 0, 1, 1, 2], [0], [0]>} : vector<2x8x8xf32>, vector<2x8x8xf32>, vector<2x8x8xf32> -> vector<2x8x8xf32>
    %124 = vector.shape_cast %123 : vector<2x8x8xf32> to vector<16x8xf32>
    %c24_60 = arith.constant 24 : index
    %c0_61 = arith.constant 0 : index
    %125 = vector.load %arg3[%c24_60, %c0_61] : memref<32x32xf32, #tpu.memory_space<vmem>>, vector<8x32xf32>
    %cst_62 = arith.constant dense<0.000000e+00> : vector<16x32xf32>
    %126 = tpu.matmul %124, %125, %cst_62 {dimension_numbers = #tpu.dot_dimension_numbers<[1], [0], [0], [1], [0, 0, 1, 1], [], []>} : vector<16x8xf32>, vector<8x32xf32>, vector<16x32xf32> -> vector<16x32xf32>
    %127 = arith.addf %96, %126 : vector<16x32xf32>
    %c0_63 = arith.constant 0 : index
    %c0_64 = arith.constant 0 : index
    %128 = vector.load %arg5[%c0_63, %c0_64] : memref<16x32xf32, #tpu.memory_space<vmem>>, vector<16x32xf32>
    tpu.vector_store %arg5[%c0_63, %c0_64], %127 {strides = array<i32>} : memref<16x32xf32, #tpu.memory_space<vmem>>, vector<16x32xf32>,
    return
  }
  func.func @transform_0(%arg0: i32) -> (i32, i32) {
    %c0_i32 = arith.constant 0 : i32
    %c0_i32_0 = arith.constant 0 : i32
    %c0_i32_1 = arith.constant 0 : i32
    return %c0_i32, %c0_i32_0 : i32, i32
  }
  func.func @transform_1(%arg0: i32) -> (i32, i32) {
    %c0_i32 = arith.constant 0 : i32
    %c0_i32_0 = arith.constant 0 : i32
    %c0_i32_1 = arith.constant 0 : i32
    return %c0_i32, %c0_i32_0 : i32, i32
  }
  func.func @transform_2(%arg0: i32) -> (i32, i32) {
    %c0_i32 = arith.constant 0 : i32
    %c0_i32_0 = arith.constant 0 : i32
    %c0_i32_1 = arith.constant 0 : i32
    return %c0_i32, %c0_i32_0 : i32, i32
  }
  func.func @transform_3(%arg0: i32) -> (i32, i32) {
    %c0_i32 = arith.constant 0 : i32
    %c0_i32_0 = arith.constant 0 : i32
    %c0_i32_1 = arith.constant 0 : i32
    return %c0_i32, %c0_i32_0 : i32, i32
  }
  func.func @transform_4(%arg0: i32) -> (i32, i32) {
    %c0_i32 = arith.constant 0 : i32
    %c0_i32_0 = arith.constant 0 : i32
    %c0_i32_1 = arith.constant 0 : i32
    return %c0_i32, %c0_i32_0 : i32, i32
  }
}

</mosaic_0001>

<llo_original>
// kernel: tpu_custom_call.1
$region0: #{tpu_custom_call.1}
  #allocation0 [shape = 'u32[]', space=smem, size = 0x4, offset = 0x4, fixed_abs, tag = 'smem constant byte address 0x4 - core index']
  #allocation1 [shape = 'u32[72,128]{1,0:T(1,128)}', space=vmem, size = 0x9000, scoped, tag = 'internal scratch']
  %s0 = inlined_call_operand.hbm [shape: f32[16,32], index: 0, kind: input, shape index: {}]
  %s1 = inlined_call_operand.hbm [shape: f32[32,96], index: 1, kind: input, shape index: {}]
  %s2 = inlined_call_operand.hbm [shape: f32[32,32], index: 2, kind: input, shape index: {}]
  %s3 = inlined_call_operand.vmem [shape: f32[1,32], index: 3, kind: input, shape index: {}]
  %s4 = inlined_call_operand.hbm [shape: f32[16,32], index: 4, kind: output, shape index: {}]
  %s5 = sld [smem:[#allocation0]]
  $region38: #{tpu_custom_call.1} parent=0
    _
  %s7 = ssub.s32 1, %s5
  %s8 = scalar_select 0, %s7, %s5
  $region1: #{tpu_custom_call.1} parent=0
    #allocation2 [shape = 'u8[8192]{0}', space=vmem, size = 0x2000, scoped, tag = 'input window, operand 0, single buffered']
    #allocation3 [shape = 's32[1]{0}', space=sflag, size = 0x4, scoped, tag = 'scoped memory for tpu_custom_call.1']
    #allocation4 [shape = 's32[1]{0}', space=sflag, size = 0x4, scoped, tag = 'scoped memory for tpu_custom_call.1']
    #allocation5 [shape = 'u8[16384]{0}', space=vmem, size = 0x4000, scoped, tag = 'input window, operand 1, single buffered']
    #allocation6 [shape = 's32[1]{0}', space=sflag, size = 0x4, scoped, tag = 'scoped memory for tpu_custom_call.1']
    #allocation7 [shape = 'u8[16384]{0}', space=vmem, size = 0x4000, scoped, tag = 'input window, operand 2, single buffered']
    #allocation8 [shape = 'u8[8192]{0}', space=vmem, size = 0x2000, scoped, tag = 'output window, operand 0, single buffered']
    %9 = vsyncpa [#allocation3], 0
    %10 = vsyncpa [#allocation6], 0
    %11 = vsyncpa [#allocation4], 0
    // Predicated region
    $region2: #{tpu_custom_call.1} parent=1 // pred_check
      _
    $region3: #{tpu_custom_call.1} parent=1 // pred_check_branch
      %13 = sbr.rel (0) target = $region5
    $region4: #{tpu_custom_call.1} parent=1 // pred_region
      %15 = vsyncadd [#allocation3], 0
      %s16 = sshll.u32 %s0, 4
      %s17 = int_to_ptr.hbm [resolvable:$true] %s16
      %s18 = sshll.u32 [#allocation2], 4
      %s19 = int_to_ptr.vmem [resolvable:$true] %s18
      %24 = dma.hbm_to_vmem [thread:$0]  %s17, 256, %s19, [#allocation3], 128, 128, 8
    $region5: #{tpu_custom_call.1} parent=1 // pred_fallthru
      _
    // Predicated region
    $region6: #{tpu_custom_call.1} parent=1 // pred_check
      _
    $region7: #{tpu_custom_call.1} parent=1 // pred_check_branch
      %26 = sbr.rel (0) target = $region9
    $region8: #{tpu_custom_call.1} parent=1 // pred_region
      %28 = vsyncadd [#allocation6], 0
      %s29 = sshll.u32 %s1, 4
      %s30 = int_to_ptr.hbm [resolvable:$true] %s29
      %s31 = sshll.u32 [#allocation5], 4
      %s32 = int_to_ptr.vmem [resolvable:$true] %s31
      %37 = dma.hbm_to_vmem [thread:$0]  %s30, 512, %s32, [#allocation6], 128, 128, 8
    $region9: #{tpu_custom_call.1} parent=1 // pred_fallthru
      _
    // Predicated region
    $region10: #{tpu_custom_call.1} parent=1 // pred_check
      _
    $region11: #{tpu_custom_call.1} parent=1 // pred_check_branch
      %39 = sbr.rel (0) target = $region13
    $region12: #{tpu_custom_call.1} parent=1 // pred_region
      %41 = vsyncadd [#allocation6], 0
      %s42 = sshll.u32 %s2, 4
      %s43 = int_to_ptr.hbm [resolvable:$true] %s42
      %s44 = sshll.u32 [#allocation7], 4
      %s45 = int_to_ptr.vmem [resolvable:$true] %s44
      %50 = dma.hbm_to_vmem [thread:$0]  %s43, 512, %s45, [#allocation6], 128, 128, 8
    $region13: #{tpu_custom_call.1} parent=1 // pred_fallthru
      _
    // Predicated region
    $region14: #{tpu_custom_call.1} parent=1 // pred_check
      _
    $region15: #{tpu_custom_call.1} parent=1 // pred_check_branch
      %52 = sbr.rel (0) target = $region17
    $region16: #{tpu_custom_call.1} parent=1 // pred_region
      _
    $region17: #{tpu_custom_call.1} parent=1 // pred_fallthru
      _
    // Predicated region
    $region18: #{tpu_custom_call.1} parent=1 // pred_check
      _
    $region19: #{tpu_custom_call.1} parent=1 // pred_check_branch
      %54 = sbr.rel (0) target = $region21
    $region20: #{tpu_custom_call.1} parent=1 // pred_region
      %56 = dma.done [#allocation3], 256
    $region21: #{tpu_custom_call.1} parent=1 // pred_fallthru
      _
    // Predicated region
    $region22: #{tpu_custom_call.1} parent=1 // pred_check
      _
    $region23: #{tpu_custom_call.1} parent=1 // pred_check_branch
      %58 = sbr.rel (0) target = $region25
    $region24: #{tpu_custom_call.1} parent=1 // pred_region
      %60 = dma.done [#allocation6], 512
    $region25: #{tpu_custom_call.1} parent=1 // pred_fallthru
      _
    // Predicated region
    $region26: #{tpu_custom_call.1} parent=1 // pred_check
      _
    $region27: #{tpu_custom_call.1} parent=1 // pred_check_branch
      %62 = sbr.rel (0) target = $region29
    $region28: #{tpu_custom_call.1} parent=1 // pred_region
      %64 = dma.done [#allocation6], 512
    $region29: #{tpu_custom_call.1} parent=1 // pred_fallthru
      _
    %v65 = vld [vmem:[#allocation2] sm:$0xff]
    %v66 = vld [vmem:[#allocation2 + $0x8] sm:$0xff]
    %v67 = vld [vmem:[%s3] sm:$0x1]
    %v69 = vperm.slane %v67, 0
    %v71 = vld [vmem:[#allocation5] sm:$0xff]
    %v72 = vld [vmem:[#allocation5 + $0x8] sm:$0xff]
    %v73 = vld [vmem:[#allocation5 + $0x10] sm:$0xff]
    %v74 = vld [vmem:[#allocation5 + $0x18] sm:$0xff]
    %vm75 = vcmask 261120
    %v77 = vsel %vm75, %v65, 0
    %v80 = vsel %vm75, %v66, 0
    %82 = vmatpush.msra.mxu0 0.0
    %83 = vmatpush.msra.mxu0 0.0
    %84 = vmatpush.msra.mxu0 0.0
    %85 = vmatpush.msra.mxu0 0.0
    %86 = vmatpush.msra.mxu0 0.0
    %87 = vmatpush.msra.mxu0 0.0
    %88 = vmatpush.msra.mxu0 0.0
    %89 = vmatpush.msra.mxu0 0.0
    %90 = vmatpush.msra.mxu0 0.0
    %91 = vmatpush.msra.mxu0 0.0
    %92 = vmatpush.msra.mxu0 0.0
    %93 = vmatpush.msra.mxu0 0.0
    %94 = vmatpush.msra.mxu0 %v74
    %95 = vmatpush.msra.mxu0 %v73
    %96 = vmatpush.msra.mxu0 %v72
    %97 = vmatpush.msra.mxu0 %v71
    %98 = vmatmul.f32.gmra.mxu0 %v77
    %v99 = vpop.f32.mrf.mxu0
    %v100 = vadd.f32 0.0, %v99
    %101 = vmatmul.f32.gmra.mxu0 %v80
    %v102 = vpop.f32.mrf.mxu0
    %v103 = vadd.f32 0.0, %v102
    %104 = vdwg.mxu0
    %v105 = vmul.f32 %v100, 0.35355338
    %v106 = vmul.f32 %v103, 0.35355338
    %111 = vrot.lane.b32.xlu0 %v71, 96
    %v112 = vpop.permute.xlu0 %111
    %113 = vrot.lane.b32.xlu0 %v72, 96
    %v114 = vpop.permute.xlu0 %113
    %115 = vrot.lane.b32.xlu0 %v73, 96
    %v116 = vpop.permute.xlu0 %115
    %117 = vrot.lane.b32.xlu0 %v74, 96
    %v118 = vpop.permute.xlu0 %117
    %123 = vmatpush.msra.mxu0 0.0
    %124 = vmatpush.msra.mxu0 0.0
    %125 = vmatpush.msra.mxu0 0.0
    %126 = vmatpush.msra.mxu0 0.0
    %127 = vmatpush.msra.mxu0 0.0
    %128 = vmatpush.msra.mxu0 0.0
    %129 = vmatpush.msra.mxu0 0.0
    %130 = vmatpush.msra.mxu0 0.0
    %131 = vmatpush.msra.mxu0 0.0
    %132 = vmatpush.msra.mxu0 0.0
    %133 = vmatpush.msra.mxu0 0.0
    %134 = vmatpush.msra.mxu0 0.0
    %135 = vmatpush.msra.mxu0 %v118
    %136 = vmatpush.msra.mxu0 %v116
    %137 = vmatpush.msra.mxu0 %v114
    %138 = vmatpush.msra.mxu0 %v112
    %139 = vmatmul.f32.gmra.mxu0 %v77
    %v140 = vpop.f32.mrf.mxu0
    %v141 = vadd.f32 0.0, %v140
    %142 = vmatmul.f32.gmra.mxu0 %v80
    %v143 = vpop.f32.mrf.mxu0
    %v144 = vadd.f32 0.0, %v143
    %145 = vdwg.mxu0
    %146 = vrot.lane.b32.xlu0 %v71, 64
    %v147 = vpop.permute.xlu0 %146
    %148 = vrot.lane.b32.xlu0 %v72, 64
    %v149 = vpop.permute.xlu0 %148
    %150 = vrot.lane.b32.xlu0 %v73, 64
    %v151 = vpop.permute.xlu0 %150
    %152 = vrot.lane.b32.xlu0 %v74, 64
    %v153 = vpop.permute.xlu0 %152
    %158 = vmatpush.msra.mxu0 0.0
    %159 = vmatpush.msra.mxu0 0.0
    %160 = vmatpush.msra.mxu0 0.0
    %161 = vmatpush.msra.mxu0 0.0
    %162 = vmatpush.msra.mxu0 0.0
    %163 = vmatpush.msra.mxu0 0.0
    %164 = vmatpush.msra.mxu0 0.0
    %165 = vmatpush.msra.mxu0 0.0
    %166 = vmatpush.msra.mxu0 0.0
    %167 = vmatpush.msra.mxu0 0.0
    %168 = vmatpush.msra.mxu0 0.0
    %169 = vmatpush.msra.mxu0 0.0
    %170 = vmatpush.msra.mxu0 %v153
    %171 = vmatpush.msra.mxu0 %v151
    %172 = vmatpush.msra.mxu0 %v149
    %173 = vmatpush.msra.mxu0 %v147
    %174 = vmatmul.f32.gmra.mxu0 %v77
    %v175 = vpop.f32.mrf.mxu0
    %v176 = vadd.f32 0.0, %v175
    %177 = vmatmul.f32.gmra.mxu0 %v80
    %v178 = vpop.f32.mrf.mxu0
    %v179 = vadd.f32 0.0, %v178
    %180 = vdwg.mxu0
    %vm181 = vcmask 64512
    %v183 = vsel %vm181, %v105, 0
    %v186 = vsel %vm181, %v141, 0
    %188 = vmatpush.xpose.msra.mxu0 0.0
    %189 = vmatpush.xpose.msra.mxu0 0.0
    %190 = vmatpush.xpose.msra.mxu0 0.0
    %191 = vmatpush.xpose.msra.mxu0 0.0
    %192 = vmatpush.xpose.msra.mxu0 0.0
    %193 = vmatpush.xpose.msra.mxu0 0.0
    %194 = vmatpush.xpose.msra.mxu0 0.0
    %195 = vmatpush.xpose.msra.mxu0 0.0
    %196 = vmatpush.xpose.msra.mxu0 0.0
    %197 = vmatpush.xpose.msra.mxu0 0.0
    %198 = vmatpush.xpose.msra.mxu0 0.0
    %199 = vmatpush.xpose.msra.mxu0 0.0
    %200 = vmatpush.xpose.msra.mxu0 0.0
    %201 = vmatpush.xpose.msra.mxu0 0.0
    %202 = vmatpush.xpose.msra.mxu0 0.0
    %203 = vmatpush.xpose.msra.mxu0 %v186
    %204 = vmatmul.f32.gmra.mxu0 %v183
    %v205 = vpop.f32.mrf.mxu0
    %v206 = vadd.f32 0.0, %v205
    %207 = vdwg.mxu0
    %v209 = vsel %vm181, %v106, 0
    %v212 = vsel %vm181, %v144, 0
    %214 = vmatpush.xpose.msra.mxu0 0.0
    %215 = vmatpush.xpose.msra.mxu0 0.0
    %216 = vmatpush.xpose.msra.mxu0 0.0
    %217 = vmatpush.xpose.msra.mxu0 0.0
    %218 = vmatpush.xpose.msra.mxu0 0.0
    %219 = vmatpush.xpose.msra.mxu0 0.0
    %220 = vmatpush.xpose.msra.mxu0 0.0
    %221 = vmatpush.xpose.msra.mxu0 0.0
    %222 = vmatpush.xpose.msra.mxu0 0.0
    %223 = vmatpush.xpose.msra.mxu0 0.0
    %224 = vmatpush.xpose.msra.mxu0 0.0
    %225 = vmatpush.xpose.msra.mxu0 0.0
    %226 = vmatpush.xpose.msra.mxu0 0.0
    %227 = vmatpush.xpose.msra.mxu0 0.0
    %228 = vmatpush.xpose.msra.mxu0 0.0
    %229 = vmatpush.xpose.msra.mxu0 %v212
    %230 = vmatmul.f32.gmra.mxu0 %v209
    %v231 = vpop.f32.mrf.mxu0
    %v232 = vadd.f32 0.0, %v231
    %233 = vdwg.mxu0
    %v234 = vsel %vm181, %v206, -inf
    %235 = vmax.xlane.f32.xlu0 %v234
    %v236 = vpop.xlane.xlu0 %235
    %v237 = vsel %vm181, %v232, -inf
    %238 = vmax.xlane.f32.xlu0 %v237
    %v239 = vpop.xlane.xlu0 %238
    %v240 = vsub.f32 %v206, %v236
    %v241 = vsub.f32 %v232, %v239
    %v242 = vmul.f32 %v240, 1.442695
    %v243 = vpow.pop %v242
    %v244 = vmul.f32 %v241, 1.442695
    %v245 = vpow.pop %v244
    %v246 = vsel %vm181, %v243, 0.0
    %247 = vadd.xlane.f32.xlu0 %v246
    %v248 = vpop.xlane.xlu0 %247
    %v249 = vsel %vm181, %v245, 0.0
    %250 = vadd.xlane.f32.xlu0 %v249
    %v251 = vpop.xlane.xlu0 %250
    %v252 = vrcp.pop %v248
    %v253 = vrcp.pop %v251
    %v254 = vmul.f32 %v248, %v252
    %v255 = vmul.f32 %v251, %v253
    %v256 = vsub.f32 2.0, %v254
    %v257 = vsub.f32 2.0, %v255
    %v258 = vmul.f32 %v252, %v256
    %v259 = vmul.f32 %v253, %v257
    %v260 = vmul.f32 %v243, %v258
    %v261 = vmul.f32 %v245, %v259
    %v263 = vsel %vm181, %v260, 0
    %265 = vmatpush.msra.mxu0 0.0
    %266 = vmatpush.msra.mxu0 0.0
    %267 = vmatpush.msra.mxu0 0.0
    %268 = vmatpush.msra.mxu0 0.0
    %269 = vmatpush.msra.mxu0 0.0
    %270 = vmatpush.msra.mxu0 0.0
    %271 = vmatpush.msra.mxu0 0.0
    %272 = vmatpush.msra.mxu0 0.0
    %273 = vmatpush.msra.mxu0 0.0
    %274 = vmatpush.msra.mxu0 0.0
    %275 = vmatpush.msra.mxu0 0.0
    %276 = vmatpush.msra.mxu0 0.0
    %277 = vmatpush.msra.mxu0 0.0
    %278 = vmatpush.msra.mxu0 0.0
    %279 = vmatpush.msra.mxu0 0.0
    %280 = vmatpush.msra.mxu0 %v176
    %281 = vmatmul.f32.gmra.mxu0 %v263
    %v282 = vpop.f32.mrf.mxu0
    %v283 = vadd.f32 0.0, %v282
    %284 = vdwg.mxu0
    %v286 = vsel %vm181, %v261, 0
    %288 = vmatpush.msra.mxu0 0.0
    %289 = vmatpush.msra.mxu0 0.0
    %290 = vmatpush.msra.mxu0 0.0
    %291 = vmatpush.msra.mxu0 0.0
    %292 = vmatpush.msra.mxu0 0.0
    %293 = vmatpush.msra.mxu0 0.0
    %294 = vmatpush.msra.mxu0 0.0
    %295 = vmatpush.msra.mxu0 0.0
    %296 = vmatpush.msra.mxu0 0.0
    %297 = vmatpush.msra.mxu0 0.0
    %298 = vmatpush.msra.mxu0 0.0
    %299 = vmatpush.msra.mxu0 0.0
    %300 = vmatpush.msra.mxu0 0.0
    %301 = vmatpush.msra.mxu0 0.0
    %302 = vmatpush.msra.mxu0 0.0
    %303 = vmatpush.msra.mxu0 %v179
    %304 = vmatmul.f32.gmra.mxu0 %v286
    %v305 = vpop.f32.mrf.mxu0
    %v306 = vadd.f32 0.0, %v305
    %307 = vdwg.mxu0
    %v308 = vld [vmem:[#allocation7] sm:$0xff]
    %v310 = vsel %vm181, %v283, 0
    %v313 = vsel %vm181, %v306, 0
    %315 = vmatpush.msra.mxu0 0.0
    %316 = vmatpush.msra.mxu0 0.0
    %317 = vmatpush.msra.mxu0 0.0
    %318 = vmatpush.msra.mxu0 0.0
    %319 = vmatpush.msra.mxu0 0.0
    %320 = vmatpush.msra.mxu0 0.0
    %321 = vmatpush.msra.mxu0 0.0
    %322 = vmatpush.msra.mxu0 0.0
    %323 = vmatpush.msra.mxu0 0.0
    %324 = vmatpush.msra.mxu0 0.0
    %325 = vmatpush.msra.mxu0 0.0
    %326 = vmatpush.msra.mxu0 0.0
    %327 = vmatpush.msra.mxu0 0.0
    %328 = vmatpush.msra.mxu0 0.0
    %329 = vmatpush.msra.mxu0 0.0
    %330 = vmatpush.msra.mxu0 %v308
    %331 = vmatmul.f32.gmra.mxu0 %v310
    %v332 = vpop.f32.mrf.mxu0
    %v333 = vadd.f32 0.0, %v332
    %334 = vmatmul.f32.gmra.mxu0 %v313
    %v335 = vpop.f32.mrf.mxu0
    %v336 = vadd.f32 0.0, %v335
    %337 = vdwg.mxu0
    %v338 = vadd.f32 %v69, %v333
    %v339 = vadd.f32 %v69, %v336
    %340 = vrot.lane.b32.xlu0 %v71, 120
    %v341 = vpop.permute.xlu0 %340
    %342 = vrot.lane.b32.xlu0 %v72, 120
    %v343 = vpop.permute.xlu0 %342
    %344 = vrot.lane.b32.xlu0 %v73, 120
    %v345 = vpop.permute.xlu0 %344
    %346 = vrot.lane.b32.xlu0 %v74, 120
    %v347 = vpop.permute.xlu0 %346
    %352 = vmatpush.msra.mxu0 0.0
    %353 = vmatpush.msra.mxu0 0.0
    %354 = vmatpush.msra.mxu0 0.0
    %355 = vmatpush.msra.mxu0 0.0
    %356 = vmatpush.msra.mxu0 0.0
    %357 = vmatpush.msra.mxu0 0.0
    %358 = vmatpush.msra.mxu0 0.0
    %359 = vmatpush.msra.mxu0 0.0
    %360 = vmatpush.msra.mxu0 0.0
    %361 = vmatpush.msra.mxu0 0.0
    %362 = vmatpush.msra.mxu0 0.0
    %363 = vmatpush.msra.mxu0 0.0
    %364 = vmatpush.msra.mxu0 %v347
    %365 = vmatpush.msra.mxu0 %v345
    %366 = vmatpush.msra.mxu0 %v343
    %367 = vmatpush.msra.mxu0 %v341
    %368 = vmatmul.f32.gmra.mxu0 %v77
    %v369 = vpop.f32.mrf.mxu0
    %v370 = vadd.f32 0.0, %v369
    %371 = vmatmul.f32.gmra.mxu0 %v80
    %v372 = vpop.f32.mrf.mxu0
    %v373 = vadd.f32 0.0, %v372
    %374 = vdwg.mxu0
    %v375 = vmul.f32 %v370, 0.35355338
    %v376 = vmul.f32 %v373, 0.35355338
    %377 = vrot.lane.b32.xlu0 %v71, 88
    %v378 = vpop.permute.xlu0 %377
    %379 = vrot.lane.b32.xlu0 %v72, 88
    %v380 = vpop.permute.xlu0 %379
    %381 = vrot.lane.b32.xlu0 %v73, 88
    %v382 = vpop.permute.xlu0 %381
    %383 = vrot.lane.b32.xlu0 %v74, 88
    %v384 = vpop.permute.xlu0 %383
    %389 = vmatpush.msra.mxu0 0.0
    %390 = vmatpush.msra.mxu0 0.0
    %391 = vmatpush.msra.mxu0 0.0
    %392 = vmatpush.msra.mxu0 0.0
    %393 = vmatpush.msra.mxu0 0.0
    %394 = vmatpush.msra.mxu0 0.0
    %395 = vmatpush.msra.mxu0 0.0
    %396 = vmatpush.msra.mxu0 0.0
    %397 = vmatpush.msra.mxu0 0.0
    %398 = vmatpush.msra.mxu0 0.0
    %399 = vmatpush.msra.mxu0 0.0
    %400 = vmatpush.msra.mxu0 0.0
    %401 = vmatpush.msra.mxu0 %v384
    %402 = vmatpush.msra.mxu0 %v382
    %403 = vmatpush.msra.mxu0 %v380
    %404 = vmatpush.msra.mxu0 %v378
    %405 = vmatmul.f32.gmra.mxu0 %v77
    %v406 = vpop.f32.mrf.mxu0
    %v407 = vadd.f32 0.0, %v406
    %408 = vmatmul.f32.gmra.mxu0 %v80
    %v409 = vpop.f32.mrf.mxu0
    %v410 = vadd.f32 0.0, %v409
    %411 = vdwg.mxu0
    %412 = vrot.lane.b32.xlu0 %v71, 56
    %v413 = vpop.permute.xlu0 %412
    %414 = vrot.lane.b32.xlu0 %v72, 56
    %v415 = vpop.permute.xlu0 %414
    %416 = vrot.lane.b32.xlu0 %v73, 56
    %v417 = vpop.permute.xlu0 %416
    %418 = vrot.lane.b32.xlu0 %v74, 56
    %v419 = vpop.permute.xlu0 %418
    %424 = vmatpush.msra.mxu0 0.0
    %425 = vmatpush.msra.mxu0 0.0
    %426 = vmatpush.msra.mxu0 0.0
    %427 = vmatpush.msra.mxu0 0.0
    %428 = vmatpush.msra.mxu0 0.0
    %429 = vmatpush.msra.mxu0 0.0
    %430 = vmatpush.msra.mxu0 0.0
    %431 = vmatpush.msra.mxu0 0.0
    %432 = vmatpush.msra.mxu0 0.0
    %433 = vmatpush.msra.mxu0 0.0
    %434 = vmatpush.msra.mxu0 0.0
    %435 = vmatpush.msra.mxu0 0.0
    %436 = vmatpush.msra.mxu0 %v419
    %437 = vmatpush.msra.mxu0 %v417
    %438 = vmatpush.msra.mxu0 %v415
    %439 = vmatpush.msra.mxu0 %v413
    %440 = vmatmul.f32.gmra.mxu0 %v77
    %v441 = vpop.f32.mrf.mxu0
    %v442 = vadd.f32 0.0, %v441
    %443 = vmatmul.f32.gmra.mxu0 %v80
    %v444 = vpop.f32.mrf.mxu0
    %v445 = vadd.f32 0.0, %v444
    %446 = vdwg.mxu0
    %v448 = vsel %vm181, %v375, 0
    %v451 = vsel %vm181, %v407, 0
    %453 = vmatpush.xpose.msra.mxu0 0.0
    %454 = vmatpush.xpose.msra.mxu0 0.0
    %455 = vmatpush.xpose.msra.mxu0 0.0
    %456 = vmatpush.xpose.msra.mxu0 0.0
    %457 = vmatpush.xpose.msra.mxu0 0.0
    %458 = vmatpush.xpose.msra.mxu0 0.0
    %459 = vmatpush.xpose.msra.mxu0 0.0
    %460 = vmatpush.xpose.msra.mxu0 0.0
    %461 = vmatpush.xpose.msra.mxu0 0.0
    %462 = vmatpush.xpose.msra.mxu0 0.0
    %463 = vmatpush.xpose.msra.mxu0 0.0
    %464 = vmatpush.xpose.msra.mxu0 0.0
    %465 = vmatpush.xpose.msra.mxu0 0.0
    %466 = vmatpush.xpose.msra.mxu0 0.0
    %467 = vmatpush.xpose.msra.mxu0 0.0
    %468 = vmatpush.xpose.msra.mxu0 %v451
    %469 = vmatmul.f32.gmra.mxu0 %v448
    %v470 = vpop.f32.mrf.mxu0
    %v471 = vadd.f32 0.0, %v470
    %472 = vdwg.mxu0
    %v474 = vsel %vm181, %v376, 0
    %v477 = vsel %vm181, %v410, 0
    %479 = vmatpush.xpose.msra.mxu0 0.0
    %480 = vmatpush.xpose.msra.mxu0 0.0
    %481 = vmatpush.xpose.msra.mxu0 0.0
    %482 = vmatpush.xpose.msra.mxu0 0.0
    %483 = vmatpush.xpose.msra.mxu0 0.0
    %484 = vmatpush.xpose.msra.mxu0 0.0
    %485 = vmatpush.xpose.msra.mxu0 0.0
    %486 = vmatpush.xpose.msra.mxu0 0.0
    %487 = vmatpush.xpose.msra.mxu0 0.0
    %488 = vmatpush.xpose.msra.mxu0 0.0
    %489 = vmatpush.xpose.msra.mxu0 0.0
    %490 = vmatpush.xpose.msra.mxu0 0.0
    %491 = vmatpush.xpose.msra.mxu0 0.0
    %492 = vmatpush.xpose.msra.mxu0 0.0
    %493 = vmatpush.xpose.msra.mxu0 0.0
    %494 = vmatpush.xpose.msra.mxu0 %v477
    %495 = vmatmul.f32.gmra.mxu0 %v474
    %v496 = vpop.f32.mrf.mxu0
    %v497 = vadd.f32 0.0, %v496
    %498 = vdwg.mxu0
    %v499 = vsel %vm181, %v471, -inf
    %500 = vmax.xlane.f32.xlu0 %v499
    %v501 = vpop.xlane.xlu0 %500
    %v502 = vsel %vm181, %v497, -inf
    %503 = vmax.xlane.f32.xlu0 %v502
    %v504 = vpop.xlane.xlu0 %503
    %v505 = vsub.f32 %v471, %v501
    %v506 = vsub.f32 %v497, %v504
    %v507 = vmul.f32 %v505, 1.442695
    %v508 = vpow.pop %v507
    %v509 = vmul.f32 %v506, 1.442695
    %v510 = vpow.pop %v509
    %v511 = vsel %vm181, %v508, 0.0
    %512 = vadd.xlane.f32.xlu0 %v511
    %v513 = vpop.xlane.xlu0 %512
    %v514 = vsel %vm181, %v510, 0.0
    %515 = vadd.xlane.f32.xlu0 %v514
    %v516 = vpop.xlane.xlu0 %515
    %v517 = vrcp.pop %v513
    %v518 = vrcp.pop %v516
    %v519 = vmul.f32 %v513, %v517
    %v520 = vmul.f32 %v516, %v518
    %v521 = vsub.f32 2.0, %v519
    %v522 = vsub.f32 2.0, %v520
    %v523 = vmul.f32 %v517, %v521
    %v524 = vmul.f32 %v518, %v522
    %v525 = vmul.f32 %v508, %v523
    %v526 = vmul.f32 %v510, %v524
    %v528 = vsel %vm181, %v525, 0
    %530 = vmatpush.msra.mxu0 0.0
    %531 = vmatpush.msra.mxu0 0.0
    %532 = vmatpush.msra.mxu0 0.0
    %533 = vmatpush.msra.mxu0 0.0
    %534 = vmatpush.msra.mxu0 0.0
    %535 = vmatpush.msra.mxu0 0.0
    %536 = vmatpush.msra.mxu0 0.0
    %537 = vmatpush.msra.mxu0 0.0
    %538 = vmatpush.msra.mxu0 0.0
    %539 = vmatpush.msra.mxu0 0.0
    %540 = vmatpush.msra.mxu0 0.0
    %541 = vmatpush.msra.mxu0 0.0
    %542 = vmatpush.msra.mxu0 0.0
    %543 = vmatpush.msra.mxu0 0.0
    %544 = vmatpush.msra.mxu0 0.0
    %545 = vmatpush.msra.mxu0 %v442
    %546 = vmatmul.f32.gmra.mxu0 %v528
    %v547 = vpop.f32.mrf.mxu0
    %v548 = vadd.f32 0.0, %v547
    %549 = vdwg.mxu0
    %v551 = vsel %vm181, %v526, 0
    %553 = vmatpush.msra.mxu0 0.0
    %554 = vmatpush.msra.mxu0 0.0
    %555 = vmatpush.msra.mxu0 0.0
    %556 = vmatpush.msra.mxu0 0.0
    %557 = vmatpush.msra.mxu0 0.0
    %558 = vmatpush.msra.mxu0 0.0
    %559 = vmatpush.msra.mxu0 0.0
    %560 = vmatpush.msra.mxu0 0.0
    %561 = vmatpush.msra.mxu0 0.0
    %562 = vmatpush.msra.mxu0 0.0
    %563 = vmatpush.msra.mxu0 0.0
    %564 = vmatpush.msra.mxu0 0.0
    %565 = vmatpush.msra.mxu0 0.0
    %566 = vmatpush.msra.mxu0 0.0
    %567 = vmatpush.msra.mxu0 0.0
    %568 = vmatpush.msra.mxu0 %v445
    %569 = vmatmul.f32.gmra.mxu0 %v551
    %v570 = vpop.f32.mrf.mxu0
    %v571 = vadd.f32 0.0, %v570
    %572 = vdwg.mxu0
    %v573 = vld [vmem:[#allocation7 + $0x8] sm:$0xff]
    %v575 = vsel %vm181, %v548, 0
    %v578 = vsel %vm181, %v571, 0
    %580 = vmatpush.msra.mxu0 0.0
    %581 = vmatpush.msra.mxu0 0.0
    %582 = vmatpush.msra.mxu0 0.0
    %583 = vmatpush.msra.mxu0 0.0
    %584 = vmatpush.msra.mxu0 0.0
    %585 = vmatpush.msra.mxu0 0.0
    %586 = vmatpush.msra.mxu0 0.0
    %587 = vmatpush.msra.mxu0 0.0
    %588 = vmatpush.msra.mxu0 0.0
    %589 = vmatpush.msra.mxu0 0.0
    %590 = vmatpush.msra.mxu0 0.0
    %591 = vmatpush.msra.mxu0 0.0
    %592 = vmatpush.msra.mxu0 0.0
    %593 = vmatpush.msra.mxu0 0.0
    %594 = vmatpush.msra.mxu0 0.0
    %595 = vmatpush.msra.mxu0 %v573
    %596 = vmatmul.f32.gmra.mxu0 %v575
    %v597 = vpop.f32.mrf.mxu0
    %v598 = vadd.f32 0.0, %v597
    %599 = vmatmul.f32.gmra.mxu0 %v578
    %v600 = vpop.f32.mrf.mxu0
    %v601 = vadd.f32 0.0, %v600
    %602 = vdwg.mxu0
    %v603 = vadd.f32 %v338, %v598
    %v604 = vadd.f32 %v339, %v601
    %605 = vrot.lane.b32.xlu0 %v71, 112
    %v606 = vpop.permute.xlu0 %605
    %607 = vrot.lane.b32.xlu0 %v72, 112
    %v608 = vpop.permute.xlu0 %607
    %609 = vrot.lane.b32.xlu0 %v73, 112
    %v610 = vpop.permute.xlu0 %609
    %611 = vrot.lane.b32.xlu0 %v74, 112
    %v612 = vpop.permute.xlu0 %611
    %617 = vmatpush.msra.mxu0 0.0
    %618 = vmatpush.msra.mxu0 0.0
    %619 = vmatpush.msra.mxu0 0.0
    %620 = vmatpush.msra.mxu0 0.0
    %621 = vmatpush.msra.mxu0 0.0
    %622 = vmatpush.msra.mxu0 0.0
    %623 = vmatpush.msra.mxu0 0.0
    %624 = vmatpush.msra.mxu0 0.0
    %625 = vmatpush.msra.mxu0 0.0
    %626 = vmatpush.msra.mxu0 0.0
    %627 = vmatpush.msra.mxu0 0.0
    %628 = vmatpush.msra.mxu0 0.0
    %629 = vmatpush.msra.mxu0 %v612
    %630 = vmatpush.msra.mxu0 %v610
    %631 = vmatpush.msra.mxu0 %v608
    %632 = vmatpush.msra.mxu0 %v606
    %633 = vmatmul.f32.gmra.mxu0 %v77
    %v634 = vpop.f32.mrf.mxu0
    %v635 = vadd.f32 0.0, %v634
    %636 = vmatmul.f32.gmra.mxu0 %v80
    %v637 = vpop.f32.mrf.mxu0
    %v638 = vadd.f32 0.0, %v637
    %639 = vdwg.mxu0
    %v640 = vmul.f32 %v635, 0.35355338
    %v641 = vmul.f32 %v638, 0.35355338
    %642 = vrot.lane.b32.xlu0 %v71, 80
    %v643 = vpop.permute.xlu0 %642
    %644 = vrot.lane.b32.xlu0 %v72, 80
    %v645 = vpop.permute.xlu0 %644
    %646 = vrot.lane.b32.xlu0 %v73, 80
    %v647 = vpop.permute.xlu0 %646
    %648 = vrot.lane.b32.xlu0 %v74, 80
    %v649 = vpop.permute.xlu0 %648
    %654 = vmatpush.msra.mxu0 0.0
    %655 = vmatpush.msra.mxu0 0.0
    %656 = vmatpush.msra.mxu0 0.0
    %657 = vmatpush.msra.mxu0 0.0
    %658 = vmatpush.msra.mxu0 0.0
    %659 = vmatpush.msra.mxu0 0.0
    %660 = vmatpush.msra.mxu0 0.0
    %661 = vmatpush.msra.mxu0 0.0
    %662 = vmatpush.msra.mxu0 0.0
    %663 = vmatpush.msra.mxu0 0.0
    %664 = vmatpush.msra.mxu0 0.0
    %665 = vmatpush.msra.mxu0 0.0
    %666 = vmatpush.msra.mxu0 %v649
    %667 = vmatpush.msra.mxu0 %v647
    %668 = vmatpush.msra.mxu0 %v645
    %669 = vmatpush.msra.mxu0 %v643
    %670 = vmatmul.f32.gmra.mxu0 %v77
    %v671 = vpop.f32.mrf.mxu0
    %v672 = vadd.f32 0.0, %v671
    %673 = vmatmul.f32.gmra.mxu0 %v80
    %v674 = vpop.f32.mrf.mxu0
    %v675 = vadd.f32 0.0, %v674
    %676 = vdwg.mxu0
    %677 = vrot.lane.b32.xlu0 %v71, 48
    %v678 = vpop.permute.xlu0 %677
    %679 = vrot.lane.b32.xlu0 %v72, 48
    %v680 = vpop.permute.xlu0 %679
    %681 = vrot.lane.b32.xlu0 %v73, 48
    %v682 = vpop.permute.xlu0 %681
    %683 = vrot.lane.b32.xlu0 %v74, 48
    %v684 = vpop.permute.xlu0 %683
    %689 = vmatpush.msra.mxu0 0.0
    %690 = vmatpush.msra.mxu0 0.0
    %691 = vmatpush.msra.mxu0 0.0
    %692 = vmatpush.msra.mxu0 0.0
    %693 = vmatpush.msra.mxu0 0.0
    %694 = vmatpush.msra.mxu0 0.0
    %695 = vmatpush.msra.mxu0 0.0
    %696 = vmatpush.msra.mxu0 0.0
    %697 = vmatpush.msra.mxu0 0.0
    %698 = vmatpush.msra.mxu0 0.0
    %699 = vmatpush.msra.mxu0 0.0
    %700 = vmatpush.msra.mxu0 0.0
    %701 = vmatpush.msra.mxu0 %v684
    %702 = vmatpush.msra.mxu0 %v682
    %703 = vmatpush.msra.mxu0 %v680
    %704 = vmatpush.msra.mxu0 %v678
    %705 = vmatmul.f32.gmra.mxu0 %v77
    %v706 = vpop.f32.mrf.mxu0
    %v707 = vadd.f32 0.0, %v706
    %708 = vmatmul.f32.gmra.mxu0 %v80
    %v709 = vpop.f32.mrf.mxu0
    %v710 = vadd.f32 0.0, %v709
    %711 = vdwg.mxu0
    %v713 = vsel %vm181, %v640, 0
    %v716 = vsel %vm181, %v672, 0
    %718 = vmatpush.xpose.msra.mxu0 0.0
    %719 = vmatpush.xpose.msra.mxu0 0.0
    %720 = vmatpush.xpose.msra.mxu0 0.0
    %721 = vmatpush.xpose.msra.mxu0 0.0
    %722 = vmatpush.xpose.msra.mxu0 0.0
    %723 = vmatpush.xpose.msra.mxu0 0.0
    %724 = vmatpush.xpose.msra.mxu0 0.0
    %725 = vmatpush.xpose.msra.mxu0 0.0
    %726 = vmatpush.xpose.msra.mxu0 0.0
    %727 = vmatpush.xpose.msra.mxu0 0.0
    %728 = vmatpush.xpose.msra.mxu0 0.0
    %729 = vmatpush.xpose.msra.mxu0 0.0
    %730 = vmatpush.xpose.msra.mxu0 0.0
    %731 = vmatpush.xpose.msra.mxu0 0.0
    %732 = vmatpush.xpose.msra.mxu0 0.0
    %733 = vmatpush.xpose.msra.mxu0 %v716
    %734 = vmatmul.f32.gmra.mxu0 %v713
    %v735 = vpop.f32.mrf.mxu0
    %v736 = vadd.f32 0.0, %v735
    %737 = vdwg.mxu0
    %v739 = vsel %vm181, %v641, 0
    %v742 = vsel %vm181, %v675, 0
    %744 = vmatpush.xpose.msra.mxu0 0.0
    %745 = vmatpush.xpose.msra.mxu0 0.0
    %746 = vmatpush.xpose.msra.mxu0 0.0
    %747 = vmatpush.xpose.msra.mxu0 0.0
    %748 = vmatpush.xpose.msra.mxu0 0.0
    %749 = vmatpush.xpose.msra.mxu0 0.0
    %750 = vmatpush.xpose.msra.mxu0 0.0
    %751 = vmatpush.xpose.msra.mxu0 0.0
    %752 = vmatpush.xpose.msra.mxu0 0.0
    %753 = vmatpush.xpose.msra.mxu0 0.0
    %754 = vmatpush.xpose.msra.mxu0 0.0
    %755 = vmatpush.xpose.msra.mxu0 0.0
    %756 = vmatpush.xpose.msra.mxu0 0.0
    %757 = vmatpush.xpose.msra.mxu0 0.0
    %758 = vmatpush.xpose.msra.mxu0 0.0
    %759 = vmatpush.xpose.msra.mxu0 %v742
    %760 = vmatmul.f32.gmra.mxu0 %v739
    %v761 = vpop.f32.mrf.mxu0
    %v762 = vadd.f32 0.0, %v761
    %763 = vdwg.mxu0
    %v764 = vsel %vm181, %v736, -inf
    %765 = vmax.xlane.f32.xlu0 %v764
    %v766 = vpop.xlane.xlu0 %765
    %v767 = vsel %vm181, %v762, -inf
    %768 = vmax.xlane.f32.xlu0 %v767
    %v769 = vpop.xlane.xlu0 %768
    %v770 = vsub.f32 %v736, %v766
    %v771 = vsub.f32 %v762, %v769
    %v772 = vmul.f32 %v770, 1.442695
    %v773 = vpow.pop %v772
    %v774 = vmul.f32 %v771, 1.442695
    %v775 = vpow.pop %v774
    %v776 = vsel %vm181, %v773, 0.0
    %777 = vadd.xlane.f32.xlu0 %v776
    %v778 = vpop.xlane.xlu0 %777
    %v779 = vsel %vm181, %v775, 0.0
    %780 = vadd.xlane.f32.xlu0 %v779
    %v781 = vpop.xlane.xlu0 %780
    %v782 = vrcp.pop %v778
    %v783 = vrcp.pop %v781
    %v784 = vmul.f32 %v778, %v782
    %v785 = vmul.f32 %v781, %v783
    %v786 = vsub.f32 2.0, %v784
    %v787 = vsub.f32 2.0, %v785
    %v788 = vmul.f32 %v782, %v786
    %v789 = vmul.f32 %v783, %v787
    %v790 = vmul.f32 %v773, %v788
    %v791 = vmul.f32 %v775, %v789
    %v793 = vsel %vm181, %v790, 0
    %795 = vmatpush.msra.mxu0 0.0
    %796 = vmatpush.msra.mxu0 0.0
    %797 = vmatpush.msra.mxu0 0.0
    %798 = vmatpush.msra.mxu0 0.0
    %799 = vmatpush.msra.mxu0 0.0
    %800 = vmatpush.msra.mxu0 0.0
    %801 = vmatpush.msra.mxu0 0.0
    %802 = vmatpush.msra.mxu0 0.0
    %803 = vmatpush.msra.mxu0 0.0
    %804 = vmatpush.msra.mxu0 0.0
    %805 = vmatpush.msra.mxu0 0.0
    %806 = vmatpush.msra.mxu0 0.0
    %807 = vmatpush.msra.mxu0 0.0
    %808 = vmatpush.msra.mxu0 0.0
    %809 = vmatpush.msra.mxu0 0.0
    %810 = vmatpush.msra.mxu0 %v707
    %811 = vmatmul.f32.gmra.mxu0 %v793
    %v812 = vpop.f32.mrf.mxu0
    %v813 = vadd.f32 0.0, %v812
    %814 = vdwg.mxu0
    %v816 = vsel %vm181, %v791, 0
    %818 = vmatpush.msra.mxu0 0.0
    %819 = vmatpush.msra.mxu0 0.0
    %820 = vmatpush.msra.mxu0 0.0
    %821 = vmatpush.msra.mxu0 0.0
    %822 = vmatpush.msra.mxu0 0.0
    %823 = vmatpush.msra.mxu0 0.0
    %824 = vmatpush.msra.mxu0 0.0
    %825 = vmatpush.msra.mxu0 0.0
    %826 = vmatpush.msra.mxu0 0.0
    %827 = vmatpush.msra.mxu0 0.0
    %828 = vmatpush.msra.mxu0 0.0
    %829 = vmatpush.msra.mxu0 0.0
    %830 = vmatpush.msra.mxu0 0.0
    %831 = vmatpush.msra.mxu0 0.0
    %832 = vmatpush.msra.mxu0 0.0
    %833 = vmatpush.msra.mxu0 %v710
    %834 = vmatmul.f32.gmra.mxu0 %v816
    %v835 = vpop.f32.mrf.mxu0
    %v836 = vadd.f32 0.0, %v835
    %837 = vdwg.mxu0
    %v838 = vld [vmem:[#allocation7 + $0x10] sm:$0xff]
    %v840 = vsel %vm181, %v813, 0
    %v843 = vsel %vm181, %v836, 0
    %845 = vmatpush.msra.mxu0 0.0
    %846 = vmatpush.msra.mxu0 0.0
    %847 = vmatpush.msra.mxu0 0.0
    %848 = vmatpush.msra.mxu0 0.0
    %849 = vmatpush.msra.mxu0 0.0
    %850 = vmatpush.msra.mxu0 0.0
    %851 = vmatpush.msra.mxu0 0.0
    %852 = vmatpush.msra.mxu0 0.0
    %853 = vmatpush.msra.mxu0 0.0
    %854 = vmatpush.msra.mxu0 0.0
    %855 = vmatpush.msra.mxu0 0.0
    %856 = vmatpush.msra.mxu0 0.0
    %857 = vmatpush.msra.mxu0 0.0
    %858 = vmatpush.msra.mxu0 0.0
    %859 = vmatpush.msra.mxu0 0.0
    %860 = vmatpush.msra.mxu0 %v838
    %861 = vmatmul.f32.gmra.mxu0 %v840
    %v862 = vpop.f32.mrf.mxu0
    %v863 = vadd.f32 0.0, %v862
    %864 = vmatmul.f32.gmra.mxu0 %v843
    %v865 = vpop.f32.mrf.mxu0
    %v866 = vadd.f32 0.0, %v865
    %867 = vdwg.mxu0
    %v868 = vadd.f32 %v603, %v863
    %v869 = vadd.f32 %v604, %v866
    %870 = vrot.lane.b32.xlu0 %v71, 104
    %v871 = vpop.permute.xlu0 %870
    %872 = vrot.lane.b32.xlu0 %v72, 104
    %v873 = vpop.permute.xlu0 %872
    %874 = vrot.lane.b32.xlu0 %v73, 104
    %v875 = vpop.permute.xlu0 %874
    %876 = vrot.lane.b32.xlu0 %v74, 104
    %v877 = vpop.permute.xlu0 %876
    %882 = vmatpush.msra.mxu0 0.0
    %883 = vmatpush.msra.mxu0 0.0
    %884 = vmatpush.msra.mxu0 0.0
    %885 = vmatpush.msra.mxu0 0.0
    %886 = vmatpush.msra.mxu0 0.0
    %887 = vmatpush.msra.mxu0 0.0
    %888 = vmatpush.msra.mxu0 0.0
    %889 = vmatpush.msra.mxu0 0.0
    %890 = vmatpush.msra.mxu0 0.0
    %891 = vmatpush.msra.mxu0 0.0
    %892 = vmatpush.msra.mxu0 0.0
    %893 = vmatpush.msra.mxu0 0.0
    %894 = vmatpush.msra.mxu0 %v877
    %895 = vmatpush.msra.mxu0 %v875
    %896 = vmatpush.msra.mxu0 %v873
    %897 = vmatpush.msra.mxu0 %v871
    %898 = vmatmul.f32.gmra.mxu0 %v77
    %v899 = vpop.f32.mrf.mxu0
    %v900 = vadd.f32 0.0, %v899
    %901 = vmatmul.f32.gmra.mxu0 %v80
    %v902 = vpop.f32.mrf.mxu0
    %v903 = vadd.f32 0.0, %v902
    %904 = vdwg.mxu0
    %v905 = vmul.f32 %v900, 0.35355338
    %v906 = vmul.f32 %v903, 0.35355338
    %907 = vrot.lane.b32.xlu0 %v71, 72
    %v908 = vpop.permute.xlu0 %907
    %909 = vrot.lane.b32.xlu0 %v72, 72
    %v910 = vpop.permute.xlu0 %909
    %911 = vrot.lane.b32.xlu0 %v73, 72
    %v912 = vpop.permute.xlu0 %911
    %913 = vrot.lane.b32.xlu0 %v74, 72
    %v914 = vpop.permute.xlu0 %913
    %919 = vmatpush.msra.mxu0 0.0
    %920 = vmatpush.msra.mxu0 0.0
    %921 = vmatpush.msra.mxu0 0.0
    %922 = vmatpush.msra.mxu0 0.0
    %923 = vmatpush.msra.mxu0 0.0
    %924 = vmatpush.msra.mxu0 0.0
    %925 = vmatpush.msra.mxu0 0.0
    %926 = vmatpush.msra.mxu0 0.0
    %927 = vmatpush.msra.mxu0 0.0
    %928 = vmatpush.msra.mxu0 0.0
    %929 = vmatpush.msra.mxu0 0.0
    %930 = vmatpush.msra.mxu0 0.0
    %931 = vmatpush.msra.mxu0 %v914
    %932 = vmatpush.msra.mxu0 %v912
    %933 = vmatpush.msra.mxu0 %v910
    %934 = vmatpush.msra.mxu0 %v908
    %935 = vmatmul.f32.gmra.mxu0 %v77
    %v936 = vpop.f32.mrf.mxu0
    %v937 = vadd.f32 0.0, %v936
    %938 = vmatmul.f32.gmra.mxu0 %v80
    %v939 = vpop.f32.mrf.mxu0
    %v940 = vadd.f32 0.0, %v939
    %941 = vdwg.mxu0
    %942 = vrot.lane.b32.xlu0 %v71, 40
    %v943 = vpop.permute.xlu0 %942
    %944 = vrot.lane.b32.xlu0 %v72, 40
    %v945 = vpop.permute.xlu0 %944
    %946 = vrot.lane.b32.xlu0 %v73, 40
    %v947 = vpop.permute.xlu0 %946
    %948 = vrot.lane.b32.xlu0 %v74, 40
    %v949 = vpop.permute.xlu0 %948
    %954 = vmatpush.msra.mxu0 0.0
    %955 = vmatpush.msra.mxu0 0.0
    %956 = vmatpush.msra.mxu0 0.0
    %957 = vmatpush.msra.mxu0 0.0
    %958 = vmatpush.msra.mxu0 0.0
    %959 = vmatpush.msra.mxu0 0.0
    %960 = vmatpush.msra.mxu0 0.0
    %961 = vmatpush.msra.mxu0 0.0
    %962 = vmatpush.msra.mxu0 0.0
    %963 = vmatpush.msra.mxu0 0.0
    %964 = vmatpush.msra.mxu0 0.0
    %965 = vmatpush.msra.mxu0 0.0
    %966 = vmatpush.msra.mxu0 %v949
    %967 = vmatpush.msra.mxu0 %v947
    %968 = vmatpush.msra.mxu0 %v945
    %969 = vmatpush.msra.mxu0 %v943
    %970 = vmatmul.f32.gmra.mxu0 %v77
    %v971 = vpop.f32.mrf.mxu0
    %v972 = vadd.f32 0.0, %v971
    %973 = vmatmul.f32.gmra.mxu0 %v80
    %v974 = vpop.f32.mrf.mxu0
    %v975 = vadd.f32 0.0, %v974
    %976 = vdwg.mxu0
    %v978 = vsel %vm181, %v905, 0
    %v981 = vsel %vm181, %v937, 0
    %983 = vmatpush.xpose.msra.mxu0 0.0
    %984 = vmatpush.xpose.msra.mxu0 0.0
    %985 = vmatpush.xpose.msra.mxu0 0.0
    %986 = vmatpush.xpose.msra.mxu0 0.0
    %987 = vmatpush.xpose.msra.mxu0 0.0
    %988 = vmatpush.xpose.msra.mxu0 0.0
    %989 = vmatpush.xpose.msra.mxu0 0.0
    %990 = vmatpush.xpose.msra.mxu0 0.0
    %991 = vmatpush.xpose.msra.mxu0 0.0
    %992 = vmatpush.xpose.msra.mxu0 0.0
    %993 = vmatpush.xpose.msra.mxu0 0.0
    %994 = vmatpush.xpose.msra.mxu0 0.0
    %995 = vmatpush.xpose.msra.mxu0 0.0
    %996 = vmatpush.xpose.msra.mxu0 0.0
    %997 = vmatpush.xpose.msra.mxu0 0.0
    %998 = vmatpush.xpose.msra.mxu0 %v981
    %999 = vmatmul.f32.gmra.mxu0 %v978
    %v1000 = vpop.f32.mrf.mxu0
    %v1001 = vadd.f32 0.0, %v1000
    %1002 = vdwg.mxu0
    %v1004 = vsel %vm181, %v906, 0
    %v1007 = vsel %vm181, %v940, 0
    %1009 = vmatpush.xpose.msra.mxu0 0.0
    %1010 = vmatpush.xpose.msra.mxu0 0.0
    %1011 = vmatpush.xpose.msra.mxu0 0.0
    %1012 = vmatpush.xpose.msra.mxu0 0.0
    %1013 = vmatpush.xpose.msra.mxu0 0.0
    %1014 = vmatpush.xpose.msra.mxu0 0.0
    %1015 = vmatpush.xpose.msra.mxu0 0.0
    %1016 = vmatpush.xpose.msra.mxu0 0.0
    %1017 = vmatpush.xpose.msra.mxu0 0.0
    %1018 = vmatpush.xpose.msra.mxu0 0.0
    %1019 = vmatpush.xpose.msra.mxu0 0.0
    %1020 = vmatpush.xpose.msra.mxu0 0.0
    %1021 = vmatpush.xpose.msra.mxu0 0.0
    %1022 = vmatpush.xpose.msra.mxu0 0.0
    %1023 = vmatpush.xpose.msra.mxu0 0.0
    %1024 = vmatpush.xpose.msra.mxu0 %v1007
    %1025 = vmatmul.f32.gmra.mxu0 %v1004
    %v1026 = vpop.f32.mrf.mxu0
    %v1027 = vadd.f32 0.0, %v1026
    %1028 = vdwg.mxu0
    %v1029 = vsel %vm181, %v1001, -inf
    %1030 = vmax.xlane.f32.xlu0 %v1029
    %v1031 = vpop.xlane.xlu0 %1030
    %v1032 = vsel %vm181, %v1027, -inf
    %1033 = vmax.xlane.f32.xlu0 %v1032
    %v1034 = vpop.xlane.xlu0 %1033
    %v1035 = vsub.f32 %v1001, %v1031
    %v1036 = vsub.f32 %v1027, %v1034
    %v1037 = vmul.f32 %v1035, 1.442695
    %v1038 = vpow.pop %v1037
    %v1039 = vmul.f32 %v1036, 1.442695
    %v1040 = vpow.pop %v1039
    %v1041 = vsel %vm181, %v1038, 0.0
    %1042 = vadd.xlane.f32.xlu0 %v1041
    %v1043 = vpop.xlane.xlu0 %1042
    %v1044 = vsel %vm181, %v1040, 0.0
    %1045 = vadd.xlane.f32.xlu0 %v1044
    %v1046 = vpop.xlane.xlu0 %1045
    %v1047 = vrcp.pop %v1043
    %v1048 = vrcp.pop %v1046
    %v1049 = vmul.f32 %v1043, %v1047
    %v1050 = vmul.f32 %v1046, %v1048
    %v1051 = vsub.f32 2.0, %v1049
    %v1052 = vsub.f32 2.0, %v1050
    %v1053 = vmul.f32 %v1047, %v1051
    %v1054 = vmul.f32 %v1048, %v1052
    %v1055 = vmul.f32 %v1038, %v1053
    %v1056 = vmul.f32 %v1040, %v1054
    %v1058 = vsel %vm181, %v1055, 0
    %1060 = vmatpush.msra.mxu0 0.0
    %1061 = vmatpush.msra.mxu0 0.0
    %1062 = vmatpush.msra.mxu0 0.0
    %1063 = vmatpush.msra.mxu0 0.0
    %1064 = vmatpush.msra.mxu0 0.0
    %1065 = vmatpush.msra.mxu0 0.0
    %1066 = vmatpush.msra.mxu0 0.0
    %1067 = vmatpush.msra.mxu0 0.0
    %1068 = vmatpush.msra.mxu0 0.0
    %1069 = vmatpush.msra.mxu0 0.0
    %1070 = vmatpush.msra.mxu0 0.0
    %1071 = vmatpush.msra.mxu0 0.0
    %1072 = vmatpush.msra.mxu0 0.0
    %1073 = vmatpush.msra.mxu0 0.0
    %1074 = vmatpush.msra.mxu0 0.0
    %1075 = vmatpush.msra.mxu0 %v972
    %1076 = vmatmul.f32.gmra.mxu0 %v1058
    %v1077 = vpop.f32.mrf.mxu0
    %v1078 = vadd.f32 0.0, %v1077
    %1079 = vdwg.mxu0
    %v1081 = vsel %vm181, %v1056, 0
    %1083 = vmatpush.msra.mxu0 0.0
    %1084 = vmatpush.msra.mxu0 0.0
    %1085 = vmatpush.msra.mxu0 0.0
    %1086 = vmatpush.msra.mxu0 0.0
    %1087 = vmatpush.msra.mxu0 0.0
    %1088 = vmatpush.msra.mxu0 0.0
    %1089 = vmatpush.msra.mxu0 0.0
    %1090 = vmatpush.msra.mxu0 0.0
    %1091 = vmatpush.msra.mxu0 0.0
    %1092 = vmatpush.msra.mxu0 0.0
    %1093 = vmatpush.msra.mxu0 0.0
    %1094 = vmatpush.msra.mxu0 0.0
    %1095 = vmatpush.msra.mxu0 0.0
    %1096 = vmatpush.msra.mxu0 0.0
    %1097 = vmatpush.msra.mxu0 0.0
    %1098 = vmatpush.msra.mxu0 %v975
    %1099 = vmatmul.f32.gmra.mxu0 %v1081
    %v1100 = vpop.f32.mrf.mxu0
    %v1101 = vadd.f32 0.0, %v1100
    %1102 = vdwg.mxu0
    %v1103 = vld [vmem:[#allocation7 + $0x18] sm:$0xff]
    %v1105 = vsel %vm181, %v1078, 0
    %v1108 = vsel %vm181, %v1101, 0
    %1110 = vmatpush.msra.mxu0 0.0
    %1111 = vmatpush.msra.mxu0 0.0
    %1112 = vmatpush.msra.mxu0 0.0
    %1113 = vmatpush.msra.mxu0 0.0
    %1114 = vmatpush.msra.mxu0 0.0
    %1115 = vmatpush.msra.mxu0 0.0
    %1116 = vmatpush.msra.mxu0 0.0
    %1117 = vmatpush.msra.mxu0 0.0
    %1118 = vmatpush.msra.mxu0 0.0
    %1119 = vmatpush.msra.mxu0 0.0
    %1120 = vmatpush.msra.mxu0 0.0
    %1121 = vmatpush.msra.mxu0 0.0
    %1122 = vmatpush.msra.mxu0 0.0
    %1123 = vmatpush.msra.mxu0 0.0
    %1124 = vmatpush.msra.mxu0 0.0
    %1125 = vmatpush.msra.mxu0 %v1103
    %1126 = vmatmul.f32.gmra.mxu0 %v1105
    %v1127 = vpop.f32.mrf.mxu0
    %v1128 = vadd.f32 0.0, %v1127
    %1129 = vmatmul.f32.gmra.mxu0 %v1108
    %v1130 = vpop.f32.mrf.mxu0
    %v1131 = vadd.f32 0.0, %v1130
    %1132 = vdwg.mxu0
    %v1133 = vadd.f32 %v868, %v1128
    %v1134 = vadd.f32 %v869, %v1131
    %1135 = vst.msk [vmem:[#allocation8] sm:$0xff] %vm75, %v1133
    %1136 = vst.msk [vmem:[#allocation8 + $0x8] sm:$0xff] %vm75, %v1134
    // Predicated region
    $region30: #{tpu_custom_call.1} parent=1 // pred_check
      _
    $region31: #{tpu_custom_call.1} parent=1 // pred_check_branch
      %1138 = sbr.rel (0) target = $region33
    $region32: #{tpu_custom_call.1} parent=1 // pred_region
      %1140 = vsyncadd [#allocation4], 0
      %s1141 = sshll.u32 [#allocation8], 4
      %s1142 = int_to_ptr.vmem [resolvable:$true] %s1141
      %s1143 = sshll.u32 %s4, 4
      %s1144 = int_to_ptr.hbm [resolvable:$true] %s1143
      %1149 = dma.vmem_to_hbm [thread:$0]  %s1142, 256, %s1144, [#allocation4], 128, 128, 8
    $region33: #{tpu_custom_call.1} parent=1 // pred_fallthru
      _
    // Predicated region
    $region34: #{tpu_custom_call.1} parent=1 // pred_check
      _
    $region35: #{tpu_custom_call.1} parent=1 // pred_check_branch
      %1151 = sbr.rel (0) target = $region37
    $region36: #{tpu_custom_call.1} parent=1 // pred_region
      %1153 = dma.done [#allocation4], 256
    $region37: #{tpu_custom_call.1} parent=1 // pred_fallthru
      _
    %1154 = vsyncpa [#allocation3], 1
    %1155 = vsyncpa [#allocation6], 1
    %1156 = vsyncpa [#allocation4], 1

</llo_original>
